<compile_context>
chip_gen: v5e
topology: v5e:2x2
jax: 0.10.0
libtpu: 0.0.40
codegen_flags: <defaults>
</compile_context>

<pallas_src>
import jax
import jax.numpy as jnp
import numpy as np
from jax import lax
from jax.experimental import pallas as pl
from jax.experimental.pallas import tpu as pltpu


def random_net_kernel(x_ref, b_ref, a_ref, o_ref):
    x = x_ref[...].astype(jnp.float32)
    n = x.shape[0]
    d = x.shape[1]
    num_blocks = b_ref.shape[0]
    inv_n = 1.0 / n
    inv_nm1 = 1.0 / (n - 1)  # torch.std is unbiased (divide by N-1)

    for blk in range(num_blocks):  # static unrolled loop, weights VMEM-resident
        # SpectralNormBlock hot path: two MXU matmuls + ReLU.
        h = jnp.maximum(
            jnp.dot(x, b_ref[blk], preferred_element_type=jnp.float32), 0.0
        )
        out = jnp.dot(h, a_ref[blk], preferred_element_type=jnp.float32)

        # Single cross-sublane reduction for (sum, sum-of-squares): reduce the
        # lane-concatenated [out | out*out] (N, 2D) block once, then split.
        stats = jnp.sum(
            jnp.concatenate([out, out * out], axis=1), axis=0, keepdims=True
        )
        s_out = stats[:, :d]
        ss_out = stats[:, d:]
        var_out = jnp.maximum((ss_out - s_out * s_out * inv_n) * inv_nm1, 0.0)
        # max(std) == sqrt(max(var)); one rsqrt instead of sqrt + divide.
        x = x + out * lax.rsqrt(jnp.max(var_out))

        # Post-block normalization over the batch dimension, same fused stats.
        stats_x = jnp.sum(
            jnp.concatenate([x, x * x], axis=1), axis=0, keepdims=True
        )
        s_x = stats_x[:, :d]
        ss_x = stats_x[:, d:]
        mu_x = s_x * inv_n
        var_x = jnp.maximum((ss_x - s_x * mu_x) * inv_nm1, 0.0)
        # Reference: 1/(std + 1e-8); rsqrt(var + 1e-16) differs only when a
        # column variance is ~0 (never for random data) — per review, accepted.
        inv_std_x = lax.rsqrt(var_x + 1e-16)
        x = (x - mu_x) * inv_std_x

    o_ref[...] = x.astype(o_ref.dtype)


def random_network_forward(x, B_stack, A_stack):
    """Single (N, D) input: one pallas_call, no grid, full-array VMEM blocks."""
    N, D = x.shape
    return pl.pallas_call(
        random_net_kernel,
        out_shape=jax.ShapeDtypeStruct((N, D), x.dtype),
        in_specs=[pl.BlockSpec(memory_space=pltpu.MemorySpace.VMEM)] * 3,
        out_specs=pl.BlockSpec(memory_space=pltpu.MemorySpace.VMEM),
    )(x, B_stack, A_stack)


def random_network_forward_batched(xs, B_stack, A_stack):
    """G independent (N, D) inputs in ONE pallas_call.

    Amortizes launch cost + weight DMA (constant index_map keeps B/A resident
    in VMEM across grid steps).  The batch axis is marked "parallel" so on v7x
    it shards across both TensorCores; per-group batch statistics are computed
    independently inside the kernel (each grid step sees one (N, D) group).
    """
    G, N, D = xs.shape
    nb, _, hid = B_stack.shape
    return pl.pallas_call(
        random_net_kernel,
        out_shape=jax.ShapeDtypeStruct((G, N, D), xs.dtype),
        grid=(G,),
        in_specs=[
            pl.BlockSpec((None, N, D), lambda g: (g, 0, 0)),   # per-group x
            pl.BlockSpec((nb, D, hid), lambda g: (0, 0, 0)),   # weights: constant
            pl.BlockSpec((nb, hid, D), lambda g: (0, 0, 0)),   # weights: constant
        ],
        out_specs=pl.BlockSpec((None, N, D), lambda g: (g, 0, 0)),
        compiler_params=pltpu.CompilerParams(
            dimension_semantics=("parallel",)
        ),
    )(xs, B_stack, A_stack)


def make_spectral_params(key, D, num_blocks):
    """Deterministic re-implementation of SpectralNormBlock.__init__.

    TODO(synk): the SVD-based spectral re-scaling is init-time host work (numpy),
    not part of the forward pass, so it is not expressed as a Pallas kernel.
    """
    hid = 4 * D
    Bs, As = [], []
    for _ in range(num_blocks):
        key, kb, ksb, ka, ksa = jax.random.split(key, 5)

        Braw = np.asarray(jax.random.normal(kb, (D, hid), dtype=jnp.float32))
        U, S, Vt = np.linalg.svd(Braw, full_matrices=False)
        S_new = np.asarray(jax.random.uniform(ksb, (S.shape[0],))) * 0.5 + 0.5
        S_new = np.sort(S_new)[::-1]
        Bs.append((U @ np.diag(S_new) @ Vt).astype(np.float32))

        Araw = np.asarray(jax.random.normal(ka, (hid, D), dtype=jnp.float32))
        U, S, Vt = np.linalg.svd(Araw, full_matrices=False)
        S_new = np.asarray(jax.random.uniform(ksa, (S.shape[0],))) * 0.25 + 0.75
        S_new = np.sort(S_new)[::-1]
        As.append((U @ np.diag(S_new) @ Vt).astype(np.float32))

    return jnp.asarray(np.stack(Bs)), jnp.asarray(np.stack(As))


def reference_forward(x, B_stack, A_stack):
    """Pure-JAX reference of RandomNetwork.forward (torch semantics)."""
    n = x.shape[0]
    for b in range(B_stack.shape[0]):
        out = jnp.maximum(x @ B_stack[b], 0.0) @ A_stack[b]
        mu = jnp.mean(out, axis=0, keepdims=True)
        std = jnp.sqrt(jnp.sum((out - mu) ** 2, axis=0, keepdims=True) / (n - 1))
        x = x + out / jnp.max(std)
        mu_x = jnp.mean(x, axis=0, keepdims=True)
        std_x = jnp.sqrt(jnp.sum((x - mu_x) ** 2, axis=0, keepdims=True) / (n - 1))
        x = (x - mu_x) / (std_x + 1e-8)
    return x


if __name__ == "__main__":
    # Small shapes consistent with the module: dim=24, n_components=8 -> D=32,
    # hid_dim=128, num_blocks=3, batch N=16; G=4 groups for the batched path.
    dim, n_components, num_blocks = 24, 8, 3
    D = dim + n_components
    N = 16
    G = 4

    key = jax.random.PRNGKey(0)
    kx, kxs, kp = jax.random.split(key, 3)
    x = jax.random.normal(kx, (N, D), dtype=jnp.float32)
    xs = jax.random.normal(kxs, (G, N, D), dtype=jnp.float32)
    B_stack, A_stack = make_spectral_params(kp, D, num_blocks)

    # Single-input path.
    out = random_network_forward(x, B_stack, A_stack)
    jax.block_until_ready(out)
    ref = reference_forward(x, B_stack, A_stack)
    np.testing.assert_allclose(np.asarray(out), np.asarray(ref), rtol=1e-4, atol=1e-4)

    # Batched path (launch + weight-DMA amortized across G inputs).
    outs = random_network_forward_batched(xs, B_stack, A_stack)
    jax.block_until_ready(outs)
    for g in range(G):
        ref_g = reference_forward(xs[g], B_stack, A_stack)
        np.testing.assert_allclose(
            np.asarray(outs[g]), np.asarray(ref_g), rtol=1e-4, atol=1e-4
        )

    print("KERNEL_OK")
</pallas_src>

<mosaic_0001>
module attributes {stable_mosaic.version = 11 : i64} {
  func.func @random_net_kernel(%arg0: memref<16x32xf32, #tpu.memory_space<vmem>>, %arg1: memref<3x32x128xf32, #tpu.memory_space<vmem>>, %arg2: memref<3x128x32xf32, #tpu.memory_space<vmem>>, %arg3: memref<16x32xf32, #tpu.memory_space<vmem>>) attributes {dimension_semantics = [], scalar_prefetch = 0 : i64, scratch_operands = 0 : i64, tpu.core_type = #tpu.core_type<tc>} {
    %c0 = arith.constant 0 : index
    %c0_0 = arith.constant 0 : index
    %0 = vector.load %arg0[%c0, %c0_0] : memref<16x32xf32, #tpu.memory_space<vmem>>, vector<16x32xf32>
    %c0_1 = arith.constant 0 : index
    %c0_2 = arith.constant 0 : index
    %c0_3 = arith.constant 0 : index
    %1 = vector.load %arg1[%c0_1, %c0_2, %c0_3] : memref<3x32x128xf32, #tpu.memory_space<vmem>>, vector<1x32x128xf32>
    %2 = vector.shape_cast %1 : vector<1x32x128xf32> to vector<32x128xf32>
    %cst = arith.constant dense<0.000000e+00> : vector<16x128xf32>
    %3 = tpu.matmul %0, %2, %cst {dimension_numbers = #tpu.dot_dimension_numbers<[1], [0], [0], [1], [0, 0, 1, 1], [], []>} : vector<16x32xf32>, vector<32x128xf32>, vector<16x128xf32> -> vector<16x128xf32>
    %cst_4 = arith.constant 0.000000e+00 : f32
    %4 = vector.broadcast %cst_4 : f32 to vector<16x128xf32>
    %5 = arith.maximumf %3, %4 : vector<16x128xf32>
    %c0_5 = arith.constant 0 : index
    %c0_6 = arith.constant 0 : index
    %c0_7 = arith.constant 0 : index
    %6 = vector.load %arg2[%c0_5, %c0_6, %c0_7] : memref<3x128x32xf32, #tpu.memory_space<vmem>>, vector<1x128x32xf32>
    %7 = vector.shape_cast %6 : vector<1x128x32xf32> to vector<128x32xf32>
    %cst_8 = arith.constant dense<0.000000e+00> : vector<16x32xf32>
    %8 = tpu.matmul %5, %7, %cst_8 {dimension_numbers = #tpu.dot_dimension_numbers<[1], [0], [0], [1], [0, 0, 1, 1], [], []>} : vector<16x128xf32>, vector<128x32xf32>, vector<16x32xf32> -> vector<16x32xf32>
    %9 = arith.mulf %8, %8 : vector<16x32xf32>
    %10 = tpu.concatenate %8, %9 in 1 : vector<16x32xf32>, vector<16x32xf32> -> vector<16x64xf32>
    %cst_9 = arith.constant dense<0.000000e+00> : vector<64xf32>
    %11 = vector.multi_reduction <add>, %10, %cst_9 [0] : vector<16x64xf32> to vector<64xf32>
    %12 = vector.shape_cast %11 : vector<64xf32> to vector<1x64xf32>
    %13 = vector.extract_strided_slice %12 {offsets = [0, 0], sizes = [1, 32], strides = [1, 1]} : vector<1x64xf32> to vector<1x32xf32>
    %14 = vector.extract_strided_slice %12 {offsets = [0, 32], sizes = [1, 32], strides = [1, 1]} : vector<1x64xf32> to vector<1x32xf32>
    %15 = arith.mulf %13, %13 : vector<1x32xf32>
    %cst_10 = arith.constant 6.250000e-02 : f32
    %16 = vector.broadcast %cst_10 : f32 to vector<1x32xf32>
    %17 = arith.mulf %15, %16 : vector<1x32xf32>
    %18 = arith.subf %14, %17 : vector<1x32xf32>
    %cst_11 = arith.constant 0.0666666701 : f32
    %19 = vector.broadcast %cst_11 : f32 to vector<1x32xf32>
    %20 = arith.mulf %18, %19 : vector<1x32xf32>
    %cst_12 = arith.constant 0.000000e+00 : f32
    %21 = vector.broadcast %cst_12 : f32 to vector<1x32xf32>
    %22 = arith.maximumf %20, %21 : vector<1x32xf32>
    %23 = vector.shape_cast %22 : vector<1x32xf32> to vector<1x1x32xf32>
    %cst_13 = arith.constant dense<0xFF800000> : vector<1xf32>
    %24 = vector.multi_reduction <maximumf>, %23, %cst_13 [1, 2] : vector<1x1x32xf32> to vector<1xf32>
    %25 = vector.shape_cast %24 : vector<1xf32> to vector<1x1x1xf32>
    %26 = vector.extract %25[0, 0, 0] : f32 from vector<1x1x1xf32>
    %27 = math.rsqrt %26 : f32
    %28 = vector.broadcast %27 : f32 to vector<16x32xf32>
    %29 = arith.mulf %8, %28 : vector<16x32xf32>
    %30 = arith.addf %0, %29 : vector<16x32xf32>
    %31 = arith.mulf %30, %30 : vector<16x32xf32>
    %32 = tpu.concatenate %30, %31 in 1 : vector<16x32xf32>, vector<16x32xf32> -> vector<16x64xf32>
    %cst_14 = arith.constant dense<0.000000e+00> : vector<64xf32>
    %33 = vector.multi_reduction <add>, %32, %cst_14 [0] : vector<16x64xf32> to vector<64xf32>
    %34 = vector.shape_cast %33 : vector<64xf32> to vector<1x64xf32>
    %35 = vector.extract_strided_slice %34 {offsets = [0, 0], sizes = [1, 32], strides = [1, 1]} : vector<1x64xf32> to vector<1x32xf32>
    %36 = vector.extract_strided_slice %34 {offsets = [0, 32], sizes = [1, 32], strides = [1, 1]} : vector<1x64xf32> to vector<1x32xf32>
    %cst_15 = arith.constant 6.250000e-02 : f32
    %37 = vector.broadcast %cst_15 : f32 to vector<1x32xf32>
    %38 = arith.mulf %35, %37 : vector<1x32xf32>
    %39 = arith.mulf %35, %38 : vector<1x32xf32>
    %40 = arith.subf %36, %39 : vector<1x32xf32>
    %cst_16 = arith.constant 0.0666666701 : f32
    %41 = vector.broadcast %cst_16 : f32 to vector<1x32xf32>
    %42 = arith.mulf %40, %41 : vector<1x32xf32>
    %cst_17 = arith.constant 0.000000e+00 : f32
    %43 = vector.broadcast %cst_17 : f32 to vector<1x32xf32>
    %44 = arith.maximumf %42, %43 : vector<1x32xf32>
    %cst_18 = arith.constant 1.000000e-16 : f32
    %45 = vector.broadcast %cst_18 : f32 to vector<1x32xf32>
    %46 = arith.addf %44, %45 : vector<1x32xf32>
    %47 = math.rsqrt %46 : vector<1x32xf32>
    %48 = vector.broadcast %38 : vector<1x32xf32> to vector<16x32xf32>
    %49 = arith.subf %30, %48 : vector<16x32xf32>
    %50 = vector.broadcast %47 : vector<1x32xf32> to vector<16x32xf32>
    %51 = arith.mulf %49, %50 : vector<16x32xf32>
    %c1 = arith.constant 1 : index
    %c0_19 = arith.constant 0 : index
    %c0_20 = arith.constant 0 : index
    %52 = vector.load %arg1[%c1, %c0_19, %c0_20] : memref<3x32x128xf32, #tpu.memory_space<vmem>>, vector<1x32x128xf32>
    %53 = vector.shape_cast %52 : vector<1x32x128xf32> to vector<32x128xf32>
    %cst_21 = arith.constant dense<0.000000e+00> : vector<16x128xf32>
    %54 = tpu.matmul %51, %53, %cst_21 {dimension_numbers = #tpu.dot_dimension_numbers<[1], [0], [0], [1], [0, 0, 1, 1], [], []>} : vector<16x32xf32>, vector<32x128xf32>, vector<16x128xf32> -> vector<16x128xf32>
    %cst_22 = arith.constant 0.000000e+00 : f32
    %55 = vector.broadcast %cst_22 : f32 to vector<16x128xf32>
    %56 = arith.maximumf %54, %55 : vector<16x128xf32>
    %c1_23 = arith.constant 1 : index
    %c0_24 = arith.constant 0 : index
    %c0_25 = arith.constant 0 : index
    %57 = vector.load %arg2[%c1_23, %c0_24, %c0_25] : memref<3x128x32xf32, #tpu.memory_space<vmem>>, vector<1x128x32xf32>
    %58 = vector.shape_cast %57 : vector<1x128x32xf32> to vector<128x32xf32>
    %cst_26 = arith.constant dense<0.000000e+00> : vector<16x32xf32>
    %59 = tpu.matmul %56, %58, %cst_26 {dimension_numbers = #tpu.dot_dimension_numbers<[1], [0], [0], [1], [0, 0, 1, 1], [], []>} : vector<16x128xf32>, vector<128x32xf32>, vector<16x32xf32> -> vector<16x32xf32>
    %60 = arith.mulf %59, %59 : vector<16x32xf32>
    %61 = tpu.concatenate %59, %60 in 1 : vector<16x32xf32>, vector<16x32xf32> -> vector<16x64xf32>
    %cst_27 = arith.constant dense<0.000000e+00> : vector<64xf32>
    %62 = vector.multi_reduction <add>, %61, %cst_27 [0] : vector<16x64xf32> to vector<64xf32>
    %63 = vector.shape_cast %62 : vector<64xf32> to vector<1x64xf32>
    %64 = vector.extract_strided_slice %63 {offsets = [0, 0], sizes = [1, 32], strides = [1, 1]} : vector<1x64xf32> to vector<1x32xf32>
    %65 = vector.extract_strided_slice %63 {offsets = [0, 32], sizes = [1, 32], strides = [1, 1]} : vector<1x64xf32> to vector<1x32xf32>
    %66 = arith.mulf %64, %64 : vector<1x32xf32>
    %cst_28 = arith.constant 6.250000e-02 : f32
    %67 = vector.broadcast %cst_28 : f32 to vector<1x32xf32>
    %68 = arith.mulf %66, %67 : vector<1x32xf32>
    %69 = arith.subf %65, %68 : vector<1x32xf32>
    %cst_29 = arith.constant 0.0666666701 : f32
    %70 = vector.broadcast %cst_29 : f32 to vector<1x32xf32>
    %71 = arith.mulf %69, %70 : vector<1x32xf32>
    %cst_30 = arith.constant 0.000000e+00 : f32
    %72 = vector.broadcast %cst_30 : f32 to vector<1x32xf32>
    %73 = arith.maximumf %71, %72 : vector<1x32xf32>
    %74 = vector.shape_cast %73 : vector<1x32xf32> to vector<1x1x32xf32>
    %cst_31 = arith.constant dense<0xFF800000> : vector<1xf32>
    %75 = vector.multi_reduction <maximumf>, %74, %cst_31 [1, 2] : vector<1x1x32xf32> to vector<1xf32>
    %76 = vector.shape_cast %75 : vector<1xf32> to vector<1x1x1xf32>
    %77 = vector.extract %76[0, 0, 0] : f32 from vector<1x1x1xf32>
    %78 = math.rsqrt %77 : f32
    %79 = vector.broadcast %78 : f32 to vector<16x32xf32>
    %80 = arith.mulf %59, %79 : vector<16x32xf32>
    %81 = arith.addf %51, %80 : vector<16x32xf32>
    %82 = arith.mulf %81, %81 : vector<16x32xf32>
    %83 = tpu.concatenate %81, %82 in 1 : vector<16x32xf32>, vector<16x32xf32> -> vector<16x64xf32>
    %cst_32 = arith.constant dense<0.000000e+00> : vector<64xf32>
    %84 = vector.multi_reduction <add>, %83, %cst_32 [0] : vector<16x64xf32> to vector<64xf32>
    %85 = vector.shape_cast %84 : vector<64xf32> to vector<1x64xf32>
    %86 = vector.extract_strided_slice %85 {offsets = [0, 0], sizes = [1, 32], strides = [1, 1]} : vector<1x64xf32> to vector<1x32xf32>
    %87 = vector.extract_strided_slice %85 {offsets = [0, 32], sizes = [1, 32], strides = [1, 1]} : vector<1x64xf32> to vector<1x32xf32>
    %cst_33 = arith.constant 6.250000e-02 : f32
    %88 = vector.broadcast %cst_33 : f32 to vector<1x32xf32>
    %89 = arith.mulf %86, %88 : vector<1x32xf32>
    %90 = arith.mulf %86, %89 : vector<1x32xf32>
    %91 = arith.subf %87, %90 : vector<1x32xf32>
    %cst_34 = arith.constant 0.0666666701 : f32
    %92 = vector.broadcast %cst_34 : f32 to vector<1x32xf32>
    %93 = arith.mulf %91, %92 : vector<1x32xf32>
    %cst_35 = arith.constant 0.000000e+00 : f32
    %94 = vector.broadcast %cst_35 : f32 to vector<1x32xf32>
    %95 = arith.maximumf %93, %94 : vector<1x32xf32>
    %cst_36 = arith.constant 1.000000e-16 : f32
    %96 = vector.broadcast %cst_36 : f32 to vector<1x32xf32>
    %97 = arith.addf %95, %96 : vector<1x32xf32>
    %98 = math.rsqrt %97 : vector<1x32xf32>
    %99 = vector.broadcast %89 : vector<1x32xf32> to vector<16x32xf32>
    %100 = arith.subf %81, %99 : vector<16x32xf32>
    %101 = vector.broadcast %98 : vector<1x32xf32> to vector<16x32xf32>
    %102 = arith.mulf %100, %101 : vector<16x32xf32>
    %c2 = arith.constant 2 : index
    %c0_37 = arith.constant 0 : index
    %c0_38 = arith.constant 0 : index
    %103 = vector.load %arg1[%c2, %c0_37, %c0_38] : memref<3x32x128xf32, #tpu.memory_space<vmem>>, vector<1x32x128xf32>
    %104 = vector.shape_cast %103 : vector<1x32x128xf32> to vector<32x128xf32>
    %cst_39 = arith.constant dense<0.000000e+00> : vector<16x128xf32>
    %105 = tpu.matmul %102, %104, %cst_39 {dimension_numbers = #tpu.dot_dimension_numbers<[1], [0], [0], [1], [0, 0, 1, 1], [], []>} : vector<16x32xf32>, vector<32x128xf32>, vector<16x128xf32> -> vector<16x128xf32>
    %cst_40 = arith.constant 0.000000e+00 : f32
    %106 = vector.broadcast %cst_40 : f32 to vector<16x128xf32>
    %107 = arith.maximumf %105, %106 : vector<16x128xf32>
    %c2_41 = arith.constant 2 : index
    %c0_42 = arith.constant 0 : index
    %c0_43 = arith.constant 0 : index
    %108 = vector.load %arg2[%c2_41, %c0_42, %c0_43] : memref<3x128x32xf32, #tpu.memory_space<vmem>>, vector<1x128x32xf32>
    %109 = vector.shape_cast %108 : vector<1x128x32xf32> to vector<128x32xf32>
    %cst_44 = arith.constant dense<0.000000e+00> : vector<16x32xf32>
    %110 = tpu.matmul %107, %109, %cst_44 {dimension_numbers = #tpu.dot_dimension_numbers<[1], [0], [0], [1], [0, 0, 1, 1], [], []>} : vector<16x128xf32>, vector<128x32xf32>, vector<16x32xf32> -> vector<16x32xf32>
    %111 = arith.mulf %110, %110 : vector<16x32xf32>
    %112 = tpu.concatenate %110, %111 in 1 : vector<16x32xf32>, vector<16x32xf32> -> vector<16x64xf32>
    %cst_45 = arith.constant dense<0.000000e+00> : vector<64xf32>
    %113 = vector.multi_reduction <add>, %112, %cst_45 [0] : vector<16x64xf32> to vector<64xf32>
    %114 = vector.shape_cast %113 : vector<64xf32> to vector<1x64xf32>
    %115 = vector.extract_strided_slice %114 {offsets = [0, 0], sizes = [1, 32], strides = [1, 1]} : vector<1x64xf32> to vector<1x32xf32>
    %116 = vector.extract_strided_slice %114 {offsets = [0, 32], sizes = [1, 32], strides = [1, 1]} : vector<1x64xf32> to vector<1x32xf32>
    %117 = arith.mulf %115, %115 : vector<1x32xf32>
    %cst_46 = arith.constant 6.250000e-02 : f32
    %118 = vector.broadcast %cst_46 : f32 to vector<1x32xf32>
    %119 = arith.mulf %117, %118 : vector<1x32xf32>
    %120 = arith.subf %116, %119 : vector<1x32xf32>
    %cst_47 = arith.constant 0.0666666701 : f32
    %121 = vector.broadcast %cst_47 : f32 to vector<1x32xf32>
    %122 = arith.mulf %120, %121 : vector<1x32xf32>
    %cst_48 = arith.constant 0.000000e+00 : f32
    %123 = vector.broadcast %cst_48 : f32 to vector<1x32xf32>
    %124 = arith.maximumf %122, %123 : vector<1x32xf32>
    %125 = vector.shape_cast %124 : vector<1x32xf32> to vector<1x1x32xf32>
    %cst_49 = arith.constant dense<0xFF800000> : vector<1xf32>
    %126 = vector.multi_reduction <maximumf>, %125, %cst_49 [1, 2] : vector<1x1x32xf32> to vector<1xf32>
    %127 = vector.shape_cast %126 : vector<1xf32> to vector<1x1x1xf32>
    %128 = vector.extract %127[0, 0, 0] : f32 from vector<1x1x1xf32>
    %129 = math.rsqrt %128 : f32
    %130 = vector.broadcast %129 : f32 to vector<16x32xf32>
    %131 = arith.mulf %110, %130 : vector<16x32xf32>
    %132 = arith.addf %102, %131 : vector<16x32xf32>
    %133 = arith.mulf %132, %132 : vector<16x32xf32>
    %134 = tpu.concatenate %132, %133 in 1 : vector<16x32xf32>, vector<16x32xf32> -> vector<16x64xf32>
    %cst_50 = arith.constant dense<0.000000e+00> : vector<64xf32>
    %135 = vector.multi_reduction <add>, %134, %cst_50 [0] : vector<16x64xf32> to vector<64xf32>
    %136 = vector.shape_cast %135 : vector<64xf32> to vector<1x64xf32>
    %137 = vector.extract_strided_slice %136 {offsets = [0, 0], sizes = [1, 32], strides = [1, 1]} : vector<1x64xf32> to vector<1x32xf32>
    %138 = vector.extract_strided_slice %136 {offsets = [0, 32], sizes = [1, 32], strides = [1, 1]} : vector<1x64xf32> to vector<1x32xf32>
    %cst_51 = arith.constant 6.250000e-02 : f32
    %139 = vector.broadcast %cst_51 : f32 to vector<1x32xf32>
    %140 = arith.mulf %137, %139 : vector<1x32xf32>
    %141 = arith.mulf %137, %140 : vector<1x32xf32>
    %142 = arith.subf %138, %141 : vector<1x32xf32>
    %cst_52 = arith.constant 0.0666666701 : f32
    %143 = vector.broadcast %cst_52 : f32 to vector<1x32xf32>
    %144 = arith.mulf %142, %143 : vector<1x32xf32>
    %cst_53 = arith.constant 0.000000e+00 : f32
    %145 = vector.broadcast %cst_53 : f32 to vector<1x32xf32>
    %146 = arith.maximumf %144, %145 : vector<1x32xf32>
    %cst_54 = arith.constant 1.000000e-16 : f32
    %147 = vector.broadcast %cst_54 : f32 to vector<1x32xf32>
    %148 = arith.addf %146, %147 : vector<1x32xf32>
    %149 = math.rsqrt %148 : vector<1x32xf32>
    %150 = vector.broadcast %140 : vector<1x32xf32> to vector<16x32xf32>
    %151 = arith.subf %132, %150 : vector<16x32xf32>
    %152 = vector.broadcast %149 : vector<1x32xf32> to vector<16x32xf32>
    %153 = arith.mulf %151, %152 : vector<16x32xf32>
    %c0_55 = arith.constant 0 : index
    %c0_56 = arith.constant 0 : index
    %154 = vector.load %arg3[%c0_55, %c0_56] : memref<16x32xf32, #tpu.memory_space<vmem>>, vector<16x32xf32>
    tpu.vector_store %arg3[%c0_55, %c0_56], %153 {strides = array<i32>} : memref<16x32xf32, #tpu.memory_space<vmem>>, vector<16x32xf32>,
    return
  }
}

</mosaic_0001>

<llo_original>
// kernel: tpu_custom_call.1
$region0: #{tpu_custom_call.1}
  #allocation0 [shape = 'u32[]', space=smem, size = 0x4, offset = 0x4, fixed_abs, tag = 'smem constant byte address 0x4 - core index']
  #allocation1 [shape = 'u32[72,128]{1,0:T(1,128)}', space=vmem, size = 0x9000, scoped, tag = 'internal scratch']
  %s0 = inlined_call_operand.vmem [shape: f32[16,32], index: 0, kind: input, shape index: {}]
  %s1 = inlined_call_operand.vmem [shape: f32[3,32,128], index: 1, kind: input, shape index: {}]
  %s2 = inlined_call_operand.vmem [shape: f32[3,128,32], index: 2, kind: input, shape index: {}]
  %s3 = inlined_call_operand.hbm [shape: f32[16,32], index: 3, kind: output, shape index: {}]
  %s4 = sld [smem:[#allocation0]]
  $region22: #{tpu_custom_call.1} parent=0
    _
  %s6 = ssub.s32 1, %s4
  %s7 = scalar_select 0, %s6, %s4
  $region1: #{tpu_custom_call.1} parent=0
    #allocation2 [shape = 'u8[8192]{0}', space=vmem, size = 0x2000, scoped, tag = 'output window, operand 0, single buffered']
    #allocation3 [shape = 's32[1]{0}', space=sflag, size = 0x4, scoped, tag = 'scoped memory for tpu_custom_call.1']
    %8 = vsyncpa [#allocation3], 0
    // Predicated region
    $region2: #{tpu_custom_call.1} parent=1 // pred_check
      _
    $region3: #{tpu_custom_call.1} parent=1 // pred_check_branch
      %10 = sbr.rel (0) target = $region5
    $region4: #{tpu_custom_call.1} parent=1 // pred_region
      _
    $region5: #{tpu_custom_call.1} parent=1 // pred_fallthru
      _
    // Predicated region
    $region6: #{tpu_custom_call.1} parent=1 // pred_check
      _
    $region7: #{tpu_custom_call.1} parent=1 // pred_check_branch
      %12 = sbr.rel (0) target = $region9
    $region8: #{tpu_custom_call.1} parent=1 // pred_region
      _
    $region9: #{tpu_custom_call.1} parent=1 // pred_fallthru
      _
    // Predicated region
    $region10: #{tpu_custom_call.1} parent=1 // pred_check
      _
    $region11: #{tpu_custom_call.1} parent=1 // pred_check_branch
      %14 = sbr.rel (0) target = $region13
    $region12: #{tpu_custom_call.1} parent=1 // pred_region
      _
    $region13: #{tpu_custom_call.1} parent=1 // pred_fallthru
      _
    %v15 = vld [vmem:[%s0] sm:$0xff]
    %v16 = vld [vmem:[%s0 + $0x8] sm:$0xff]
    %v17 = vld [vmem:[%s1] sm:$0xff]
    %v18 = vld [vmem:[%s1 + $0x8] sm:$0xff]
    %v19 = vld [vmem:[%s1 + $0x10] sm:$0xff]
    %v20 = vld [vmem:[%s1 + $0x18] sm:$0xff]
    %vm21 = vcmask 261120
    %v23 = vsel %vm21, %v15, 0
    %v26 = vsel %vm21, %v16, 0
    %28 = vmatpush.msra.mxu0 0.0
    %29 = vmatpush.msra.mxu0 0.0
    %30 = vmatpush.msra.mxu0 0.0
    %31 = vmatpush.msra.mxu0 0.0
    %32 = vmatpush.msra.mxu0 0.0
    %33 = vmatpush.msra.mxu0 0.0
    %34 = vmatpush.msra.mxu0 0.0
    %35 = vmatpush.msra.mxu0 0.0
    %36 = vmatpush.msra.mxu0 0.0
    %37 = vmatpush.msra.mxu0 0.0
    %38 = vmatpush.msra.mxu0 0.0
    %39 = vmatpush.msra.mxu0 0.0
    %40 = vmatpush.msra.mxu0 %v20
    %41 = vmatpush.msra.mxu0 %v19
    %42 = vmatpush.msra.mxu0 %v18
    %43 = vmatpush.msra.mxu0 %v17
    %44 = vmatmul.f32.gmra.mxu0 %v23
    %v45 = vpop.f32.mrf.mxu0
    %v46 = vadd.f32 0.0, %v45
    %47 = vmatmul.f32.gmra.mxu0 %v26
    %v48 = vpop.f32.mrf.mxu0
    %v49 = vadd.f32 0.0, %v48
    %50 = vdwg.mxu0
    %v51 = vmax.f32 %v46, 0.0
    %v52 = vmax.f32 %v49, 0.0
    %v53 = vld [vmem:[%s2] sm:$0xff]
    %v54 = vld [vmem:[%s2 + $0x8] sm:$0xff]
    %v55 = vld [vmem:[%s2 + $0x10] sm:$0xff]
    %v56 = vld [vmem:[%s2 + $0x18] sm:$0xff]
    %v57 = vld [vmem:[%s2 + $0x20] sm:$0xff]
    %v58 = vld [vmem:[%s2 + $0x28] sm:$0xff]
    %v59 = vld [vmem:[%s2 + $0x30] sm:$0xff]
    %v60 = vld [vmem:[%s2 + $0x38] sm:$0xff]
    %v61 = vld [vmem:[%s2 + $0x40] sm:$0xff]
    %v62 = vld [vmem:[%s2 + $0x48] sm:$0xff]
    %v63 = vld [vmem:[%s2 + $0x50] sm:$0xff]
    %v64 = vld [vmem:[%s2 + $0x58] sm:$0xff]
    %v65 = vld [vmem:[%s2 + $0x60] sm:$0xff]
    %v66 = vld [vmem:[%s2 + $0x68] sm:$0xff]
    %v67 = vld [vmem:[%s2 + $0x70] sm:$0xff]
    %v68 = vld [vmem:[%s2 + $0x78] sm:$0xff]
    %69 = vmatpush.msra.mxu0 %v68
    %70 = vmatpush.msra.mxu0 %v67
    %71 = vmatpush.msra.mxu0 %v66
    %72 = vmatpush.msra.mxu0 %v65
    %73 = vmatpush.msra.mxu0 %v64
    %74 = vmatpush.msra.mxu0 %v63
    %75 = vmatpush.msra.mxu0 %v62
    %76 = vmatpush.msra.mxu0 %v61
    %77 = vmatpush.msra.mxu0 %v60
    %78 = vmatpush.msra.mxu0 %v59
    %79 = vmatpush.msra.mxu0 %v58
    %80 = vmatpush.msra.mxu0 %v57
    %81 = vmatpush.msra.mxu0 %v56
    %82 = vmatpush.msra.mxu0 %v55
    %83 = vmatpush.msra.mxu0 %v54
    %84 = vmatpush.msra.mxu0 %v53
    %85 = vmatmul.f32.gmra.mxu0 %v51
    %v86 = vpop.f32.mrf.mxu0
    %v87 = vadd.f32 0.0, %v86
    %88 = vmatmul.f32.gmra.mxu0 %v52
    %v89 = vpop.f32.mrf.mxu0
    %v90 = vadd.f32 0.0, %v89
    %91 = vdwg.mxu0
    %v92 = vmul.f32 %v87, %v87
    %v93 = vmul.f32 %v90, %v90
    %96 = vrot.lane.b32.xlu0 %v92, 32
    %v97 = vpop.permute.xlu0 %96
    %98 = vrot.lane.b32.xlu0 %v93, 32
    %v99 = vpop.permute.xlu0 %98
    %v102 = vsel %vm21, %v87, %v97
    %v103 = vsel %vm21, %v90, %v99
    %vm104 = vcmask 523264
    %v105 = vsel %vm104, %v102, 0.0
    %v106 = vsel %vm104, %v103, 0.0
    %v107 = vadd.f32 %v105, %v106
    %v108 = vrot.slane %v107, 4
    %v109 = vadd.f32 %v107, %v108
    %v110 = vrot.slane %v109, 2
    %v111 = vadd.f32 %v109, %v110
    %v112 = vrot.slane %v111, 1
    %v113 = vadd.f32 %v111, %v112
    %v114 = vmul.f32 %v113, %v113
    %v115 = vmul.f32 %v114, 0.0625
    %117 = vrot.lane.b32.xlu0 %v115, 32
    %v118 = vpop.permute.xlu0 %117
    %v120 = vsub.f32 %v113, %v118
    %v121 = vmul.f32 %v120, 0.06666667
    %v122 = vmax.f32 %v121, 0.0
    %vm123 = vcmask 516352
    %v124 = vsel %vm123, %v122, -inf
    %125 = vmax.xlane.f32.xlu0 %v124
    %v126 = vpop.xlane.xlu0 %125
    %v127 = vrot.slane %v126, 4
    %v128 = vmax.f32 %v126, %v127
    %v129 = vrot.slane %v128, 2
    %v130 = vmax.f32 %v128, %v129
    %v131 = vrot.slane %v130, 1
    %v132 = vmax.f32 %v130, %v131
    %s133 = vtos %v132
    %v134 = vstv %s133
    %v135 = vrsqrt.pop %v134
    %v136 = vmul.f32 %v135, %v134
    %v137 = vmul.f32 %v136, %v135
    %v138 = vmul.f32 0.5, %v137
    %v139 = vsub.f32 1.5, %v138
    %v140 = vmul.f32 %v135, %v139
    %vm141 = vweird.f32 %v134
    %vm142 = vweird.f32 %v135
    %vm143 = vmor %vm141, %vm142
    %v144 = vsel %vm143, %v135, %v140
    %s145 = vtos %v144
    %v146 = vstv %s145
    %v147 = vmul.f32 %v87, %v146
    %v148 = vmul.f32 %v90, %v146
    %v149 = vadd.f32 %v15, %v147
    %v150 = vadd.f32 %v16, %v148
    %v151 = vmul.f32 %v149, %v149
    %v152 = vmul.f32 %v150, %v150
    %155 = vrot.lane.b32.xlu0 %v151, 32
    %v156 = vpop.permute.xlu0 %155
    %157 = vrot.lane.b32.xlu0 %v152, 32
    %v158 = vpop.permute.xlu0 %157
    %v161 = vsel %vm21, %v149, %v156
    %v162 = vsel %vm21, %v150, %v158
    %v163 = vsel %vm104, %v161, 0.0
    %v164 = vsel %vm104, %v162, 0.0
    %v165 = vadd.f32 %v163, %v164
    %v166 = vrot.slane %v165, 4
    %v167 = vadd.f32 %v165, %v166
    %v168 = vrot.slane %v167, 2
    %v169 = vadd.f32 %v167, %v168
    %v170 = vrot.slane %v169, 1
    %v171 = vadd.f32 %v169, %v170
    %v172 = vmul.f32 %v171, 0.0625
    %v173 = vmul.f32 %v171, %v172
    %175 = vrot.lane.b32.xlu0 %v173, 32
    %v176 = vpop.permute.xlu0 %175
    %v178 = vsub.f32 %v171, %v176
    %v179 = vmul.f32 %v178, 0.06666667
    %v180 = vmax.f32 %v179, 0.0
    %v181 = vadd.f32 %v180, 1e-16
    %v182 = vrsqrt.pop %v181
    %v183 = vmul.f32 %v182, %v181
    %v184 = vmul.f32 %v183, %v182
    %v185 = vmul.f32 0.5, %v184
    %v186 = vsub.f32 1.5, %v185
    %v187 = vmul.f32 %v182, %v186
    %vm188 = vweird.f32 %v181
    %vm189 = vweird.f32 %v182
    %vm190 = vmor %vm188, %vm189
    %v191 = vsel %vm190, %v182, %v187
    %v192 = vsub.f32 %v149, %v172
    %v193 = vsub.f32 %v150, %v172
    %v194 = vperm.slane %v191, 0
    %196 = vrot.lane.b32.xlu0 %v194, 96
    %v197 = vpop.permute.xlu0 %196
    %v199 = vmul.f32 %v192, %v197
    %v200 = vmul.f32 %v193, %v197
    %s201 = scalar_lea.vmem %s1, 32
    %v202 = vld [vmem:[%s201] sm:$0xff]
    %v203 = vld [vmem:[%s201 + $0x8] sm:$0xff]
    %v204 = vld [vmem:[%s201 + $0x10] sm:$0xff]
    %v205 = vld [vmem:[%s201 + $0x18] sm:$0xff]
    %v207 = vsel %vm21, %v199, 0
    %v210 = vsel %vm21, %v200, 0
    %212 = vmatpush.msra.mxu0 0.0
    %213 = vmatpush.msra.mxu0 0.0
    %214 = vmatpush.msra.mxu0 0.0
    %215 = vmatpush.msra.mxu0 0.0
    %216 = vmatpush.msra.mxu0 0.0
    %217 = vmatpush.msra.mxu0 0.0
    %218 = vmatpush.msra.mxu0 0.0
    %219 = vmatpush.msra.mxu0 0.0
    %220 = vmatpush.msra.mxu0 0.0
    %221 = vmatpush.msra.mxu0 0.0
    %222 = vmatpush.msra.mxu0 0.0
    %223 = vmatpush.msra.mxu0 0.0
    %224 = vmatpush.msra.mxu0 %v205
    %225 = vmatpush.msra.mxu0 %v204
    %226 = vmatpush.msra.mxu0 %v203
    %227 = vmatpush.msra.mxu0 %v202
    %228 = vmatmul.f32.gmra.mxu0 %v207
    %v229 = vpop.f32.mrf.mxu0
    %v230 = vadd.f32 0.0, %v229
    %231 = vmatmul.f32.gmra.mxu0 %v210
    %v232 = vpop.f32.mrf.mxu0
    %v233 = vadd.f32 0.0, %v232
    %234 = vdwg.mxu0
    %v235 = vmax.f32 %v230, 0.0
    %v236 = vmax.f32 %v233, 0.0
    %s237 = scalar_lea.vmem %s2, 128
    %v238 = vld [vmem:[%s237] sm:$0xff]
    %v239 = vld [vmem:[%s237 + $0x8] sm:$0xff]
    %v240 = vld [vmem:[%s237 + $0x10] sm:$0xff]
    %v241 = vld [vmem:[%s237 + $0x18] sm:$0xff]
    %v242 = vld [vmem:[%s237 + $0x20] sm:$0xff]
    %v243 = vld [vmem:[%s237 + $0x28] sm:$0xff]
    %v244 = vld [vmem:[%s237 + $0x30] sm:$0xff]
    %v245 = vld [vmem:[%s237 + $0x38] sm:$0xff]
    %v246 = vld [vmem:[%s237 + $0x40] sm:$0xff]
    %v247 = vld [vmem:[%s237 + $0x48] sm:$0xff]
    %v248 = vld [vmem:[%s237 + $0x50] sm:$0xff]
    %v249 = vld [vmem:[%s237 + $0x58] sm:$0xff]
    %v250 = vld [vmem:[%s237 + $0x60] sm:$0xff]
    %v251 = vld [vmem:[%s237 + $0x68] sm:$0xff]
    %v252 = vld [vmem:[%s237 + $0x70] sm:$0xff]
    %v253 = vld [vmem:[%s237 + $0x78] sm:$0xff]
    %254 = vmatpush.msra.mxu0 %v253
    %255 = vmatpush.msra.mxu0 %v252
    %256 = vmatpush.msra.mxu0 %v251
    %257 = vmatpush.msra.mxu0 %v250
    %258 = vmatpush.msra.mxu0 %v249
    %259 = vmatpush.msra.mxu0 %v248
    %260 = vmatpush.msra.mxu0 %v247
    %261 = vmatpush.msra.mxu0 %v246
    %262 = vmatpush.msra.mxu0 %v245
    %263 = vmatpush.msra.mxu0 %v244
    %264 = vmatpush.msra.mxu0 %v243
    %265 = vmatpush.msra.mxu0 %v242
    %266 = vmatpush.msra.mxu0 %v241
    %267 = vmatpush.msra.mxu0 %v240
    %268 = vmatpush.msra.mxu0 %v239
    %269 = vmatpush.msra.mxu0 %v238
    %270 = vmatmul.f32.gmra.mxu0 %v235
    %v271 = vpop.f32.mrf.mxu0
    %v272 = vadd.f32 0.0, %v271
    %273 = vmatmul.f32.gmra.mxu0 %v236
    %v274 = vpop.f32.mrf.mxu0
    %v275 = vadd.f32 0.0, %v274
    %276 = vdwg.mxu0
    %v277 = vmul.f32 %v272, %v272
    %v278 = vmul.f32 %v275, %v275
    %281 = vrot.lane.b32.xlu0 %v277, 32
    %v282 = vpop.permute.xlu0 %281
    %283 = vrot.lane.b32.xlu0 %v278, 32
    %v284 = vpop.permute.xlu0 %283
    %v287 = vsel %vm21, %v272, %v282
    %v288 = vsel %vm21, %v275, %v284
    %v289 = vsel %vm104, %v287, 0.0
    %v290 = vsel %vm104, %v288, 0.0
    %v291 = vadd.f32 %v289, %v290
    %v292 = vrot.slane %v291, 4
    %v293 = vadd.f32 %v291, %v292
    %v294 = vrot.slane %v293, 2
    %v295 = vadd.f32 %v293, %v294
    %v296 = vrot.slane %v295, 1
    %v297 = vadd.f32 %v295, %v296
    %v298 = vmul.f32 %v297, %v297
    %v299 = vmul.f32 %v298, 0.0625
    %301 = vrot.lane.b32.xlu0 %v299, 32
    %v302 = vpop.permute.xlu0 %301
    %v304 = vsub.f32 %v297, %v302
    %v305 = vmul.f32 %v304, 0.06666667
    %v306 = vmax.f32 %v305, 0.0
    %v307 = vsel %vm123, %v306, -inf
    %308 = vmax.xlane.f32.xlu0 %v307
    %v309 = vpop.xlane.xlu0 %308
    %v310 = vrot.slane %v309, 4
    %v311 = vmax.f32 %v309, %v310
    %v312 = vrot.slane %v311, 2
    %v313 = vmax.f32 %v311, %v312
    %v314 = vrot.slane %v313, 1
    %v315 = vmax.f32 %v313, %v314
    %s316 = vtos %v315
    %v317 = vstv %s316
    %v318 = vrsqrt.pop %v317
    %v319 = vmul.f32 %v318, %v317
    %v320 = vmul.f32 %v319, %v318
    %v321 = vmul.f32 0.5, %v320
    %v322 = vsub.f32 1.5, %v321
    %v323 = vmul.f32 %v318, %v322
    %vm324 = vweird.f32 %v317
    %vm325 = vweird.f32 %v318
    %vm326 = vmor %vm324, %vm325
    %v327 = vsel %vm326, %v318, %v323
    %s328 = vtos %v327
    %v329 = vstv %s328
    %v330 = vmul.f32 %v272, %v329
    %v331 = vmul.f32 %v275, %v329
    %v332 = vadd.f32 %v199, %v330
    %v333 = vadd.f32 %v200, %v331
    %v334 = vmul.f32 %v332, %v332
    %v335 = vmul.f32 %v333, %v333
    %338 = vrot.lane.b32.xlu0 %v334, 32
    %v339 = vpop.permute.xlu0 %338
    %340 = vrot.lane.b32.xlu0 %v335, 32
    %v341 = vpop.permute.xlu0 %340
    %v344 = vsel %vm21, %v332, %v339
    %v345 = vsel %vm21, %v333, %v341
    %v346 = vsel %vm104, %v344, 0.0
    %v347 = vsel %vm104, %v345, 0.0
    %v348 = vadd.f32 %v346, %v347
    %v349 = vrot.slane %v348, 4
    %v350 = vadd.f32 %v348, %v349
    %v351 = vrot.slane %v350, 2
    %v352 = vadd.f32 %v350, %v351
    %v353 = vrot.slane %v352, 1
    %v354 = vadd.f32 %v352, %v353
    %v355 = vmul.f32 %v354, 0.0625
    %v356 = vmul.f32 %v354, %v355
    %358 = vrot.lane.b32.xlu0 %v356, 32
    %v359 = vpop.permute.xlu0 %358
    %v361 = vsub.f32 %v354, %v359
    %v362 = vmul.f32 %v361, 0.06666667
    %v363 = vmax.f32 %v362, 0.0
    %v364 = vadd.f32 %v363, 1e-16
    %v365 = vrsqrt.pop %v364
    %v366 = vmul.f32 %v365, %v364
    %v367 = vmul.f32 %v366, %v365
    %v368 = vmul.f32 0.5, %v367
    %v369 = vsub.f32 1.5, %v368
    %v370 = vmul.f32 %v365, %v369
    %vm371 = vweird.f32 %v364
    %vm372 = vweird.f32 %v365
    %vm373 = vmor %vm371, %vm372
    %v374 = vsel %vm373, %v365, %v370
    %v375 = vsub.f32 %v332, %v355
    %v376 = vsub.f32 %v333, %v355
    %v377 = vperm.slane %v374, 0
    %379 = vrot.lane.b32.xlu0 %v377, 96
    %v380 = vpop.permute.xlu0 %379
    %v382 = vmul.f32 %v375, %v380
    %v383 = vmul.f32 %v376, %v380
    %s384 = scalar_lea.vmem %s1, 64
    %v385 = vld [vmem:[%s384] sm:$0xff]
    %v386 = vld [vmem:[%s384 + $0x8] sm:$0xff]
    %v387 = vld [vmem:[%s384 + $0x10] sm:$0xff]
    %v388 = vld [vmem:[%s384 + $0x18] sm:$0xff]
    %v390 = vsel %vm21, %v382, 0
    %v393 = vsel %vm21, %v383, 0
    %395 = vmatpush.msra.mxu0 0.0
    %396 = vmatpush.msra.mxu0 0.0
    %397 = vmatpush.msra.mxu0 0.0
    %398 = vmatpush.msra.mxu0 0.0
    %399 = vmatpush.msra.mxu0 0.0
    %400 = vmatpush.msra.mxu0 0.0
    %401 = vmatpush.msra.mxu0 0.0
    %402 = vmatpush.msra.mxu0 0.0
    %403 = vmatpush.msra.mxu0 0.0
    %404 = vmatpush.msra.mxu0 0.0
    %405 = vmatpush.msra.mxu0 0.0
    %406 = vmatpush.msra.mxu0 0.0
    %407 = vmatpush.msra.mxu0 %v388
    %408 = vmatpush.msra.mxu0 %v387
    %409 = vmatpush.msra.mxu0 %v386
    %410 = vmatpush.msra.mxu0 %v385
    %411 = vmatmul.f32.gmra.mxu0 %v390
    %v412 = vpop.f32.mrf.mxu0
    %v413 = vadd.f32 0.0, %v412
    %414 = vmatmul.f32.gmra.mxu0 %v393
    %v415 = vpop.f32.mrf.mxu0
    %v416 = vadd.f32 0.0, %v415
    %417 = vdwg.mxu0
    %v418 = vmax.f32 %v413, 0.0
    %v419 = vmax.f32 %v416, 0.0
    %s420 = scalar_lea.vmem %s2, 256
    %v421 = vld [vmem:[%s420] sm:$0xff]
    %v422 = vld [vmem:[%s420 + $0x8] sm:$0xff]
    %v423 = vld [vmem:[%s420 + $0x10] sm:$0xff]
    %v424 = vld [vmem:[%s420 + $0x18] sm:$0xff]
    %v425 = vld [vmem:[%s420 + $0x20] sm:$0xff]
    %v426 = vld [vmem:[%s420 + $0x28] sm:$0xff]
    %v427 = vld [vmem:[%s420 + $0x30] sm:$0xff]
    %v428 = vld [vmem:[%s420 + $0x38] sm:$0xff]
    %v429 = vld [vmem:[%s420 + $0x40] sm:$0xff]
    %v430 = vld [vmem:[%s420 + $0x48] sm:$0xff]
    %v431 = vld [vmem:[%s420 + $0x50] sm:$0xff]
    %v432 = vld [vmem:[%s420 + $0x58] sm:$0xff]
    %v433 = vld [vmem:[%s420 + $0x60] sm:$0xff]
    %v434 = vld [vmem:[%s420 + $0x68] sm:$0xff]
    %v435 = vld [vmem:[%s420 + $0x70] sm:$0xff]
    %v436 = vld [vmem:[%s420 + $0x78] sm:$0xff]
    %437 = vmatpush.msra.mxu0 %v436
    %438 = vmatpush.msra.mxu0 %v435
    %439 = vmatpush.msra.mxu0 %v434
    %440 = vmatpush.msra.mxu0 %v433
    %441 = vmatpush.msra.mxu0 %v432
    %442 = vmatpush.msra.mxu0 %v431
    %443 = vmatpush.msra.mxu0 %v430
    %444 = vmatpush.msra.mxu0 %v429
    %445 = vmatpush.msra.mxu0 %v428
    %446 = vmatpush.msra.mxu0 %v427
    %447 = vmatpush.msra.mxu0 %v426
    %448 = vmatpush.msra.mxu0 %v425
    %449 = vmatpush.msra.mxu0 %v424
    %450 = vmatpush.msra.mxu0 %v423
    %451 = vmatpush.msra.mxu0 %v422
    %452 = vmatpush.msra.mxu0 %v421
    %453 = vmatmul.f32.gmra.mxu0 %v418
    %v454 = vpop.f32.mrf.mxu0
    %v455 = vadd.f32 0.0, %v454
    %456 = vmatmul.f32.gmra.mxu0 %v419
    %v457 = vpop.f32.mrf.mxu0
    %v458 = vadd.f32 0.0, %v457
    %459 = vdwg.mxu0
    %v460 = vmul.f32 %v455, %v455
    %v461 = vmul.f32 %v458, %v458
    %464 = vrot.lane.b32.xlu0 %v460, 32
    %v465 = vpop.permute.xlu0 %464
    %466 = vrot.lane.b32.xlu0 %v461, 32
    %v467 = vpop.permute.xlu0 %466
    %v470 = vsel %vm21, %v455, %v465
    %v471 = vsel %vm21, %v458, %v467
    %v472 = vsel %vm104, %v470, 0.0
    %v473 = vsel %vm104, %v471, 0.0
    %v474 = vadd.f32 %v472, %v473
    %v475 = vrot.slane %v474, 4
    %v476 = vadd.f32 %v474, %v475
    %v477 = vrot.slane %v476, 2
    %v478 = vadd.f32 %v476, %v477
    %v479 = vrot.slane %v478, 1
    %v480 = vadd.f32 %v478, %v479
    %v481 = vmul.f32 %v480, %v480
    %v482 = vmul.f32 %v481, 0.0625
    %484 = vrot.lane.b32.xlu0 %v482, 32
    %v485 = vpop.permute.xlu0 %484
    %v487 = vsub.f32 %v480, %v485
    %v488 = vmul.f32 %v487, 0.06666667
    %v489 = vmax.f32 %v488, 0.0
    %v490 = vsel %vm123, %v489, -inf
    %491 = vmax.xlane.f32.xlu0 %v490
    %v492 = vpop.xlane.xlu0 %491
    %v493 = vrot.slane %v492, 4
    %v494 = vmax.f32 %v492, %v493
    %v495 = vrot.slane %v494, 2
    %v496 = vmax.f32 %v494, %v495
    %v497 = vrot.slane %v496, 1
    %v498 = vmax.f32 %v496, %v497
    %s499 = vtos %v498
    %v500 = vstv %s499
    %v501 = vrsqrt.pop %v500
    %v502 = vmul.f32 %v501, %v500
    %v503 = vmul.f32 %v502, %v501
    %v504 = vmul.f32 0.5, %v503
    %v505 = vsub.f32 1.5, %v504
    %v506 = vmul.f32 %v501, %v505
    %vm507 = vweird.f32 %v500
    %vm508 = vweird.f32 %v501
    %vm509 = vmor %vm507, %vm508
    %v510 = vsel %vm509, %v501, %v506
    %s511 = vtos %v510
    %v512 = vstv %s511
    %v513 = vmul.f32 %v455, %v512
    %v514 = vmul.f32 %v458, %v512
    %v515 = vadd.f32 %v382, %v513
    %v516 = vadd.f32 %v383, %v514
    %v517 = vmul.f32 %v515, %v515
    %v518 = vmul.f32 %v516, %v516
    %521 = vrot.lane.b32.xlu0 %v517, 32
    %v522 = vpop.permute.xlu0 %521
    %523 = vrot.lane.b32.xlu0 %v518, 32
    %v524 = vpop.permute.xlu0 %523
    %v527 = vsel %vm21, %v515, %v522
    %v528 = vsel %vm21, %v516, %v524
    %v529 = vsel %vm104, %v527, 0.0
    %v530 = vsel %vm104, %v528, 0.0
    %v531 = vadd.f32 %v529, %v530
    %v532 = vrot.slane %v531, 4
    %v533 = vadd.f32 %v531, %v532
    %v534 = vrot.slane %v533, 2
    %v535 = vadd.f32 %v533, %v534
    %v536 = vrot.slane %v535, 1
    %v537 = vadd.f32 %v535, %v536
    %v538 = vmul.f32 %v537, 0.0625
    %v539 = vmul.f32 %v537, %v538
    %541 = vrot.lane.b32.xlu0 %v539, 32
    %v542 = vpop.permute.xlu0 %541
    %v544 = vsub.f32 %v537, %v542
    %v545 = vmul.f32 %v544, 0.06666667
    %v546 = vmax.f32 %v545, 0.0
    %v547 = vadd.f32 %v546, 1e-16
    %v548 = vrsqrt.pop %v547
    %v549 = vmul.f32 %v548, %v547
    %v550 = vmul.f32 %v549, %v548
    %v551 = vmul.f32 0.5, %v550
    %v552 = vsub.f32 1.5, %v551
    %v553 = vmul.f32 %v548, %v552
    %vm554 = vweird.f32 %v547
    %vm555 = vweird.f32 %v548
    %vm556 = vmor %vm554, %vm555
    %v557 = vsel %vm556, %v548, %v553
    %v558 = vsub.f32 %v515, %v538
    %v559 = vsub.f32 %v516, %v538
    %v560 = vperm.slane %v557, 0
    %562 = vrot.lane.b32.xlu0 %v560, 96
    %v563 = vpop.permute.xlu0 %562
    %v565 = vmul.f32 %v558, %v563
    %v566 = vmul.f32 %v559, %v563
    %567 = vst.msk [vmem:[#allocation2] sm:$0xff] %vm21, %v565
    %568 = vst.msk [vmem:[#allocation2 + $0x8] sm:$0xff] %vm21, %v566
    // Predicated region
    $region14: #{tpu_custom_call.1} parent=1 // pred_check
      _
    $region15: #{tpu_custom_call.1} parent=1 // pred_check_branch
      %570 = sbr.rel (0) target = $region17
    $region16: #{tpu_custom_call.1} parent=1 // pred_region
      %572 = vsyncadd [#allocation3], 0
      %s573 = sshll.u32 [#allocation2], 4
      %s574 = int_to_ptr.vmem [resolvable:$true] %s573
      %s575 = sshll.u32 %s3, 4
      %s576 = int_to_ptr.hbm [resolvable:$true] %s575
      %581 = dma.vmem_to_hbm [thread:$0]  %s574, 256, %s576, [#allocation3], 128, 128, 8
    $region17: #{tpu_custom_call.1} parent=1 // pred_fallthru
      _
    // Predicated region
    $region18: #{tpu_custom_call.1} parent=1 // pred_check
      _
    $region19: #{tpu_custom_call.1} parent=1 // pred_check_branch
      %583 = sbr.rel (0) target = $region21
    $region20: #{tpu_custom_call.1} parent=1 // pred_region
      %585 = dma.done [#allocation3], 256
    $region21: #{tpu_custom_call.1} parent=1 // pred_fallthru
      _
    %586 = vsyncpa [#allocation3], 1

</llo_original>
